<compile_context>
chip_gen: v7x
topology: tpu7x:2x2x1
jax: 0.10.0
libtpu: 0.0.40
codegen_flags: <defaults>
</compile_context>

<pallas_src>
import functools

import jax
import jax.numpy as jnp
from jax.experimental import pallas as pl
from jax.experimental.pallas import tpu as pltpu

BN_EPS = 0.8          # BatchNorm1d(out_feat, 0.8): second positional arg is eps
LEAKY_SLOPE = 0.2
H1 = 128
H2 = 32

_VMEM_LIMIT = 32 * 1024 * 1024   # safe on v5e/v6e (128 MiB) and v7x (64 MiB physical)
_FUSED_MAX_ROWS = 2048           # single fused invocation at/below this batch size
_DEFAULT_BLOCK_ROWS = 512        # batch tile for the tiled path (multiple of 256)


def _lrelu(h):
    # LeakyReLU(0.2) as mul+max (cheaper than cmp+select on the VPU).
    return jnp.maximum(h, LEAKY_SLOPE * h)


# --------------------------------------------------------------------------
# Small-batch path: one fused, VMEM-resident kernel (whole-batch BN in-kernel).
# --------------------------------------------------------------------------
def _dnn_fused_kernel(x_ref, w1_ref, g1_ref, bt1_ref, w2_ref, g2_ref, bt2_ref,
                      w3_ref, b3_ref, out_ref):
    def bn_lrelu(h, g_ref, bt_ref):
        # Training-mode BN: batch mean, biased batch variance, eps = 0.8 (f32).
        mean = jnp.mean(h, axis=0, keepdims=True)
        hc = h - mean                                   # reused for var + normalize
        var = jnp.mean(hc * hc, axis=0, keepdims=True)
        s = g_ref[...] * jax.lax.rsqrt(var + BN_EPS)
        return _lrelu(hc * s + bt_ref[...])

    # Linear biases b1/b2 are omitted: dead under training-mode BN.
    h = jnp.dot(x_ref[...].astype(jnp.bfloat16), w1_ref[...],
                preferred_element_type=jnp.float32)
    h = bn_lrelu(h, g1_ref, bt1_ref)
    h = jnp.dot(h.astype(jnp.bfloat16), w2_ref[...],
                preferred_element_type=jnp.float32)
    h = bn_lrelu(h, g2_ref, bt2_ref)
    y = jnp.dot(h.astype(jnp.bfloat16), w3_ref[...],
                preferred_element_type=jnp.float32) + b3_ref[...]
    out_ref[...] = y.astype(out_ref.dtype)


def _forward_fused(x, w1, g1, bt1, w2, g2, bt2, w3, b3):
    B = x.shape[0]
    out_dim = w3.shape[1]
    vmem = pl.BlockSpec(memory_space=pltpu.MemorySpace.VMEM)
    return pl.pallas_call(
        _dnn_fused_kernel,
        out_shape=jax.ShapeDtypeStruct((B, out_dim), jnp.float32),
        in_specs=[vmem] * 9,
        out_specs=vmem,
        compiler_params=pltpu.CompilerParams(vmem_limit_bytes=_VMEM_LIMIT),
    )(x, w1, g1, bt1, w2, g2, bt2, w3, b3)


# --------------------------------------------------------------------------
# Large-batch path: batch-tiled, three passes with global BN sum/sumsq.
# --------------------------------------------------------------------------
def _row_mask(bt, block_rows, batch):
    rows = jax.lax.broadcasted_iota(jnp.int32, (block_rows, 1), 0) + bt * block_rows
    return rows < batch


def _stats1_kernel(x_ref, w1_ref, sum_ref, sq_ref, *, batch, block_rows, ragged):
    bt = pl.program_id(0)

    @pl.when(bt == 0)
    def _():
        sum_ref[...] = jnp.zeros_like(sum_ref)
        sq_ref[...] = jnp.zeros_like(sq_ref)

    h = jnp.dot(x_ref[...].astype(jnp.bfloat16), w1_ref[...],
                preferred_element_type=jnp.float32)
    if ragged:
        h = jnp.where(_row_mask(bt, block_rows, batch), h, 0.0)
    sum_ref[...] += jnp.sum(h, axis=0, keepdims=True)
    sq_ref[...] += jnp.sum(h * h, axis=0, keepdims=True)


def _stats2_kernel(x_ref, w1_ref, sc1_ref, sh1_ref, w2_ref, sum_ref, sq_ref,
                   *, batch, block_rows, ragged):
    bt = pl.program_id(0)

    @pl.when(bt == 0)
    def _():
        sum_ref[...] = jnp.zeros_like(sum_ref)
        sq_ref[...] = jnp.zeros_like(sq_ref)

    h = jnp.dot(x_ref[...].astype(jnp.bfloat16), w1_ref[...],
                preferred_element_type=jnp.float32)
    a = _lrelu(h * sc1_ref[...] + sh1_ref[...])
    h2 = jnp.dot(a.astype(jnp.bfloat16), w2_ref[...],
                 preferred_element_type=jnp.float32)
    if ragged:
        h2 = jnp.where(_row_mask(bt, block_rows, batch), h2, 0.0)
    sum_ref[...] += jnp.sum(h2, axis=0, keepdims=True)
    sq_ref[...] += jnp.sum(h2 * h2, axis=0, keepdims=True)


def _final_kernel(x_ref, w1_ref, sc1_ref, sh1_ref, w2_ref, sc2_ref, sh2_ref,
                  w3_ref, b3_ref, out_ref):
    h = jnp.dot(x_ref[...].astype(jnp.bfloat16), w1_ref[...],
                preferred_element_type=jnp.float32)
    a = _lrelu(h * sc1_ref[...] + sh1_ref[...])
    h2 = jnp.dot(a.astype(jnp.bfloat16), w2_ref[...],
                 preferred_element_type=jnp.float32)
    a2 = _lrelu(h2 * sc2_ref[...] + sh2_ref[...])
    y = jnp.dot(a2.astype(jnp.bfloat16), w3_ref[...],
                preferred_element_type=jnp.float32) + b3_ref[...]
    out_ref[...] = y.astype(out_ref.dtype)


def _bn_fold(s, sq, count, gamma, beta):
    # Tiny per-feature vectors: fold BN into one FMA (scale, shift) in f32.
    mean = s / count
    var = jnp.maximum(sq / count - mean * mean, 0.0)   # biased batch variance
    scale = gamma * jax.lax.rsqrt(var + BN_EPS)
    shift = beta - mean * scale
    return scale, shift


def _forward_tiled(x, w1, g1, bt1, w2, g2, bt2, w3, b3, block_rows):
    B, in_dim = x.shape
    out_dim = w3.shape[1]
    n_bt = pl.cdiv(B, block_rows)
    ragged = (B % block_rows) != 0

    x_spec = pl.BlockSpec((block_rows, in_dim), lambda bt: (bt, 0))
    w1_spec = pl.BlockSpec((in_dim, H1), lambda bt: (0, 0))
    w2_spec = pl.BlockSpec((H1, H2), lambda bt: (0, 0))
    w3_spec = pl.BlockSpec((H2, out_dim), lambda bt: (0, 0))
    v128 = pl.BlockSpec((1, H1), lambda bt: (0, 0))
    v32 = pl.BlockSpec((1, H2), lambda bt: (0, 0))
    v_out = pl.BlockSpec((1, out_dim), lambda bt: (0, 0))
    stats_cp = pltpu.CompilerParams(dimension_semantics=("arbitrary",),
                                    vmem_limit_bytes=_VMEM_LIMIT)

    # Pass 1: global per-feature sum / sumsq of h1 = x @ w1 over the whole batch.
    sum1, sq1 = pl.pallas_call(
        functools.partial(_stats1_kernel, batch=B, block_rows=block_rows, ragged=ragged),
        grid=(n_bt,),
        in_specs=[x_spec, w1_spec],
        out_specs=[v128, v128],
        out_shape=(jax.ShapeDtypeStruct((1, H1), jnp.float32),
                   jax.ShapeDtypeStruct((1, H1), jnp.float32)),
        compiler_params=stats_cp,
    )(x, w1)
    scale1, shift1 = _bn_fold(sum1, sq1, B, g1, bt1)

    # Pass 2: recompute h1, normalize + LeakyReLU, h2 = a1 @ w2; global h2 stats.
    sum2, sq2 = pl.pallas_call(
        functools.partial(_stats2_kernel, batch=B, block_rows=block_rows, ragged=ragged),
        grid=(n_bt,),
        in_specs=[x_spec, w1_spec, v128, v128, w2_spec],
        out_specs=[v32, v32],
        out_shape=(jax.ShapeDtypeStruct((1, H2), jnp.float32),
                   jax.ShapeDtypeStruct((1, H2), jnp.float32)),
        compiler_params=stats_cp,
    )(x, w1, scale1, shift1, w2)
    scale2, shift2 = _bn_fold(sum2, sq2, B, g2, bt2)

    # Pass 3: normalize both blocks and run the head.  No cross-tile state, so
    # the batch axis is 'parallel' (uses both TensorCores on v7x).
    return pl.pallas_call(
        _final_kernel,
        grid=(n_bt,),
        in_specs=[x_spec, w1_spec, v128, v128, w2_spec, v32, v32, w3_spec, v_out],
        out_specs=pl.BlockSpec((block_rows, out_dim), lambda bt: (bt, 0)),
        out_shape=jax.ShapeDtypeStruct((B, out_dim), jnp.float32),
        compiler_params=pltpu.CompilerParams(dimension_semantics=("parallel",),
                                             vmem_limit_bytes=_VMEM_LIMIT),
    )(x, w1, scale1, shift1, w2, scale2, shift2, w3, b3)


# --------------------------------------------------------------------------
# Public wrapper.
# --------------------------------------------------------------------------
def dnn_forward(x, params, block_rows=None):
    """x: (B, input_size) f32. params: f32 (in,out) weights / (1,out) vectors."""
    B = x.shape[0]
    w1 = params["w1"].astype(jnp.bfloat16)
    w2 = params["w2"].astype(jnp.bfloat16)
    w3 = params["w3"].astype(jnp.bfloat16)
    g1, bt1 = params["g1"], params["bt1"]
    g2, bt2 = params["g2"], params["bt2"]
    b3 = params["b3"]
    # params["b1"] / params["b2"] are intentionally NOT used: a constant
    # per-feature bias right before training-mode BatchNorm is cancelled
    # exactly by the batch-mean subtraction (bit-equivalent result).

    if block_rows is None:
        block_rows = B if B <= _FUSED_MAX_ROWS else _DEFAULT_BLOCK_ROWS
    if block_rows >= B:
        return _forward_fused(x, w1, g1, bt1, w2, g2, bt2, w3, b3)
    assert block_rows % 8 == 0, "batch tile must be a multiple of 8 sublanes"
    # TODO(synk): cross-core (CMEM) stat reduction would let the stats passes
    # also run 'parallel' on v7x; today they stay sequential for correctness.
    return _forward_tiled(x, w1, g1, bt1, w2, g2, bt2, w3, b3, block_rows)


def init_params(key, input_size, output_size):
    """PyTorch nn.Linear-style init (uniform +/- 1/sqrt(fan_in)); BN gamma=1, beta=0.
    Linear weights stored pre-transposed as (in, out)."""
    def linear(key, fan_in, fan_out):
        kw, kb = jax.random.split(key)
        bound = 1.0 / jnp.sqrt(float(fan_in))
        w = jax.random.uniform(kw, (fan_in, fan_out), jnp.float32, -bound, bound)
        b = jax.random.uniform(kb, (1, fan_out), jnp.float32, -bound, bound)
        return w, b

    k1, k2, k3 = jax.random.split(key, 3)
    w1, b1 = linear(k1, input_size, H1)
    w2, b2 = linear(k2, H1, H2)
    w3, b3 = linear(k3, H2, output_size)
    return {
        "w1": w1, "b1": b1,
        "g1": jnp.ones((1, H1), jnp.float32), "bt1": jnp.zeros((1, H1), jnp.float32),
        "w2": w2, "b2": b2,
        "g2": jnp.ones((1, H2), jnp.float32), "bt2": jnp.zeros((1, H2), jnp.float32),
        "w3": w3, "b3": b3,
    }


def dnn_reference(x, params):
    """Pure-JAX f32 reference of the same training-mode forward pass (keeps b1/b2)."""
    def bn_lrelu(h, g, bt):
        m = jnp.mean(h, axis=0, keepdims=True)
        v = jnp.mean((h - m) ** 2, axis=0, keepdims=True)
        h = (h - m) / jnp.sqrt(v + BN_EPS) * g + bt
        return jnp.where(h >= 0.0, h, LEAKY_SLOPE * h)

    h = x @ params["w1"] + params["b1"]
    h = bn_lrelu(h, params["g1"], params["bt1"])
    h = h @ params["w2"] + params["b2"]
    h = bn_lrelu(h, params["g2"], params["bt2"])
    return h @ params["w3"] + params["b3"]


if __name__ == "__main__":
    key = jax.random.PRNGKey(0)
    k_params, k_x, k_x2 = jax.random.split(key, 3)

    batch, input_size, output_size = 8, 64, 16
    params = init_params(k_params, input_size, output_size)
    x = jax.random.normal(k_x, (batch, input_size), jnp.float32)

    # Small batch -> single fused invocation.
    y = jax.block_until_ready(jax.jit(dnn_forward)(x, params))
    y_ref = dnn_reference(x, params)
    assert y.shape == (batch, output_size)
    # bf16 matmul operands (MXU fast path) -> slightly looser tolerance vs f32 ref.
    assert jnp.allclose(y, y_ref, atol=3e-2, rtol=3e-2), float(jnp.max(jnp.abs(y - y_ref)))

    # Also exercise the batch-tiled multi-pass path (global BN stats across
    # tiles + ragged last tile) by forcing an 8-row tile at a small batch.
    x2 = jax.random.normal(k_x2, (20, input_size), jnp.float32)
    fwd_tiled = jax.jit(functools.partial(dnn_forward, block_rows=8))
    y2 = jax.block_until_ready(fwd_tiled(x2, params))
    y2_ref = dnn_reference(x2, params)
    assert y2.shape == (20, output_size)
    assert jnp.allclose(y2, y2_ref, atol=3e-2, rtol=3e-2), float(jnp.max(jnp.abs(y2 - y2_ref)))

    print("KERNEL_OK")
</pallas_src>

<mosaic_0001>
module attributes {stable_mosaic.version = 11 : i64} {
  func.func @_dnn_fused_kernel(%arg0: memref<8x64xf32, #tpu.memory_space<vmem>>, %arg1: memref<64x128xbf16, #tpu.memory_space<vmem>>, %arg2: memref<1x128xf32, #tpu.memory_space<vmem>>, %arg3: memref<1x128xf32, #tpu.memory_space<vmem>>, %arg4: memref<128x32xbf16, #tpu.memory_space<vmem>>, %arg5: memref<1x32xf32, #tpu.memory_space<vmem>>, %arg6: memref<1x32xf32, #tpu.memory_space<vmem>>, %arg7: memref<32x16xbf16, #tpu.memory_space<vmem>>, %arg8: memref<1x16xf32, #tpu.memory_space<vmem>>, %arg9: memref<8x16xf32, #tpu.memory_space<vmem>>) attributes {dimension_semantics = [], scalar_prefetch = 0 : i64, scratch_operands = 0 : i64, tpu.core_type = #tpu.core_type<tc>} {
    %c0 = arith.constant 0 : index
    %c0_0 = arith.constant 0 : index
    %0 = vector.load %arg0[%c0, %c0_0] : memref<8x64xf32, #tpu.memory_space<vmem>>, vector<8x64xf32>
    %1 = arith.truncf %0 : vector<8x64xf32> to vector<8x64xbf16>
    %c0_1 = arith.constant 0 : index
    %c0_2 = arith.constant 0 : index
    %2 = vector.load %arg1[%c0_1, %c0_2] : memref<64x128xbf16, #tpu.memory_space<vmem>>, vector<64x128xbf16>
    %cst = arith.constant dense<0.000000e+00> : vector<8x128xf32>
    %3 = tpu.matmul %1, %2, %cst {dimension_numbers = #tpu.dot_dimension_numbers<[1], [0], [0], [1], [0, 0, 1, 1], [], []>} : vector<8x64xbf16>, vector<64x128xbf16>, vector<8x128xf32> -> vector<8x128xf32>
    %cst_3 = arith.constant dense<0.000000e+00> : vector<128xf32>
    %4 = vector.multi_reduction <add>, %3, %cst_3 [0] : vector<8x128xf32> to vector<128xf32>
    %5 = vector.shape_cast %4 : vector<128xf32> to vector<1x128xf32>
    %cst_4 = arith.constant 8.000000e+00 : f32
    %6 = vector.broadcast %cst_4 : f32 to vector<1x128xf32>
    %7 = arith.divf %5, %6 : vector<1x128xf32>
    %8 = vector.broadcast %7 : vector<1x128xf32> to vector<8x128xf32>
    %9 = arith.subf %3, %8 : vector<8x128xf32>
    %10 = arith.mulf %9, %9 : vector<8x128xf32>
    %cst_5 = arith.constant dense<0.000000e+00> : vector<128xf32>
    %11 = vector.multi_reduction <add>, %10, %cst_5 [0] : vector<8x128xf32> to vector<128xf32>
    %12 = vector.shape_cast %11 : vector<128xf32> to vector<1x128xf32>
    %cst_6 = arith.constant 8.000000e+00 : f32
    %13 = vector.broadcast %cst_6 : f32 to vector<1x128xf32>
    %14 = arith.divf %12, %13 : vector<1x128xf32>
    %c0_7 = arith.constant 0 : index
    %c0_8 = arith.constant 0 : index
    %15 = vector.load %arg2[%c0_7, %c0_8] : memref<1x128xf32, #tpu.memory_space<vmem>>, vector<1x128xf32>
    %cst_9 = arith.constant 8.000000e-01 : f32
    %16 = vector.broadcast %cst_9 : f32 to vector<1x128xf32>
    %17 = arith.addf %14, %16 : vector<1x128xf32>
    %18 = math.rsqrt %17 : vector<1x128xf32>
    %19 = arith.mulf %15, %18 : vector<1x128xf32>
    %20 = vector.broadcast %19 : vector<1x128xf32> to vector<8x128xf32>
    %21 = arith.mulf %9, %20 : vector<8x128xf32>
    %c0_10 = arith.constant 0 : index
    %c0_11 = arith.constant 0 : index
    %22 = vector.load %arg3[%c0_10, %c0_11] : memref<1x128xf32, #tpu.memory_space<vmem>>, vector<1x128xf32>
    %23 = vector.broadcast %22 : vector<1x128xf32> to vector<8x128xf32>
    %24 = arith.addf %21, %23 : vector<8x128xf32>
    %cst_12 = arith.constant 2.000000e-01 : f32
    %25 = vector.broadcast %cst_12 : f32 to vector<8x128xf32>
    %26 = arith.mulf %25, %24 : vector<8x128xf32>
    %27 = arith.maximumf %24, %26 : vector<8x128xf32>
    %28 = arith.truncf %27 : vector<8x128xf32> to vector<8x128xbf16>
    %c0_13 = arith.constant 0 : index
    %c0_14 = arith.constant 0 : index
    %29 = vector.load %arg4[%c0_13, %c0_14] : memref<128x32xbf16, #tpu.memory_space<vmem>>, vector<128x32xbf16>
    %cst_15 = arith.constant dense<0.000000e+00> : vector<8x32xf32>
    %30 = tpu.matmul %28, %29, %cst_15 {dimension_numbers = #tpu.dot_dimension_numbers<[1], [0], [0], [1], [0, 0, 1, 1], [], []>} : vector<8x128xbf16>, vector<128x32xbf16>, vector<8x32xf32> -> vector<8x32xf32>
    %cst_16 = arith.constant dense<0.000000e+00> : vector<32xf32>
    %31 = vector.multi_reduction <add>, %30, %cst_16 [0] : vector<8x32xf32> to vector<32xf32>
    %32 = vector.shape_cast %31 : vector<32xf32> to vector<1x32xf32>
    %cst_17 = arith.constant 8.000000e+00 : f32
    %33 = vector.broadcast %cst_17 : f32 to vector<1x32xf32>
    %34 = arith.divf %32, %33 : vector<1x32xf32>
    %35 = vector.broadcast %34 : vector<1x32xf32> to vector<8x32xf32>
    %36 = arith.subf %30, %35 : vector<8x32xf32>
    %37 = arith.mulf %36, %36 : vector<8x32xf32>
    %cst_18 = arith.constant dense<0.000000e+00> : vector<32xf32>
    %38 = vector.multi_reduction <add>, %37, %cst_18 [0] : vector<8x32xf32> to vector<32xf32>
    %39 = vector.shape_cast %38 : vector<32xf32> to vector<1x32xf32>
    %cst_19 = arith.constant 8.000000e+00 : f32
    %40 = vector.broadcast %cst_19 : f32 to vector<1x32xf32>
    %41 = arith.divf %39, %40 : vector<1x32xf32>
    %c0_20 = arith.constant 0 : index
    %c0_21 = arith.constant 0 : index
    %42 = vector.load %arg5[%c0_20, %c0_21] : memref<1x32xf32, #tpu.memory_space<vmem>>, vector<1x32xf32>
    %cst_22 = arith.constant 8.000000e-01 : f32
    %43 = vector.broadcast %cst_22 : f32 to vector<1x32xf32>
    %44 = arith.addf %41, %43 : vector<1x32xf32>
    %45 = math.rsqrt %44 : vector<1x32xf32>
    %46 = arith.mulf %42, %45 : vector<1x32xf32>
    %47 = vector.broadcast %46 : vector<1x32xf32> to vector<8x32xf32>
    %48 = arith.mulf %36, %47 : vector<8x32xf32>
    %c0_23 = arith.constant 0 : index
    %c0_24 = arith.constant 0 : index
    %49 = vector.load %arg6[%c0_23, %c0_24] : memref<1x32xf32, #tpu.memory_space<vmem>>, vector<1x32xf32>
    %50 = vector.broadcast %49 : vector<1x32xf32> to vector<8x32xf32>
    %51 = arith.addf %48, %50 : vector<8x32xf32>
    %cst_25 = arith.constant 2.000000e-01 : f32
    %52 = vector.broadcast %cst_25 : f32 to vector<8x32xf32>
    %53 = arith.mulf %52, %51 : vector<8x32xf32>
    %54 = arith.maximumf %51, %53 : vector<8x32xf32>
    %55 = arith.truncf %54 : vector<8x32xf32> to vector<8x32xbf16>
    %c0_26 = arith.constant 0 : index
    %c0_27 = arith.constant 0 : index
    %56 = vector.load %arg7[%c0_26, %c0_27] : memref<32x16xbf16, #tpu.memory_space<vmem>>, vector<32x16xbf16>
    %cst_28 = arith.constant dense<0.000000e+00> : vector<8x16xf32>
    %57 = tpu.matmul %55, %56, %cst_28 {dimension_numbers = #tpu.dot_dimension_numbers<[1], [0], [0], [1], [0, 0, 1, 1], [], []>} : vector<8x32xbf16>, vector<32x16xbf16>, vector<8x16xf32> -> vector<8x16xf32>
    %c0_29 = arith.constant 0 : index
    %c0_30 = arith.constant 0 : index
    %58 = vector.load %arg8[%c0_29, %c0_30] : memref<1x16xf32, #tpu.memory_space<vmem>>, vector<1x16xf32>
    %59 = vector.broadcast %58 : vector<1x16xf32> to vector<8x16xf32>
    %60 = arith.addf %57, %59 : vector<8x16xf32>
    %c0_31 = arith.constant 0 : index
    %c0_32 = arith.constant 0 : index
    %61 = vector.load %arg9[%c0_31, %c0_32] : memref<8x16xf32, #tpu.memory_space<vmem>>, vector<8x16xf32>
    tpu.vector_store %arg9[%c0_31, %c0_32], %60 {strides = array<i32>} : memref<8x16xf32, #tpu.memory_space<vmem>>, vector<8x16xf32>,
    return
  }
}

</mosaic_0001>

<llo_original>
// kernel: dnn_forward.1
$region0: #{dnn_forward.1}
  #allocation0 [shape = 'u32[]', space=smem, size = 0x4, offset = 0x4, fixed_abs, tag = 'smem constant byte address 0x4 - core index']
  #allocation1 [shape = 'u32[144,128]{1,0:T(1,128)}', space=vmem, size = 0x12000, scoped, tag = 'internal scratch']
  %s0 = inlined_call_operand.vmem [shape: f32[8,64], index: 0, kind: input, shape index: {}]
  %s1 = inlined_call_operand.vmem [shape: bf16[64,128], index: 1, kind: input, shape index: {}]
  %s2 = inlined_call_operand.vmem [shape: f32[1,128], index: 2, kind: input, shape index: {}]
  %s3 = inlined_call_operand.vmem [shape: f32[1,128], index: 3, kind: input, shape index: {}]
  %s4 = inlined_call_operand.vmem [shape: bf16[128,32], index: 4, kind: input, shape index: {}]
  %s5 = inlined_call_operand.vmem [shape: f32[1,32], index: 5, kind: input, shape index: {}]
  %s6 = inlined_call_operand.vmem [shape: f32[1,32], index: 6, kind: input, shape index: {}]
  %s7 = inlined_call_operand.vmem [shape: bf16[32,16], index: 7, kind: input, shape index: {}]
  %s8 = inlined_call_operand.vmem [shape: f32[1,16], index: 8, kind: input, shape index: {}]
  %s9 = inlined_call_operand.hbm [shape: f32[8,16], index: 9, kind: output, shape index: {}]
  %s10 = sld [smem:[#allocation0]]
  $region46: #{dnn_forward.1} parent=0
    _
  %s12 = ssub.s32 1, %s10
  %s13 = scalar_select 0, %s12, %s10
  $region1: #{dnn_forward.1} parent=0
    #allocation2 [shape = 'u8[4096]{0}', space=vmem, size = 0x1000, scoped, tag = 'output window, operand 0, single buffered']
    #allocation3 [shape = 's32[1]{0}', space=sflag, size = 0x4, scoped, tag = 'scoped memory for dnn_forward.1']
    %14 = vsyncpa [#allocation3], 0
    // Predicated region
    $region2: #{dnn_forward.1} parent=1 // pred_check
      _
    $region3: #{dnn_forward.1} parent=1 // pred_check_branch
      %16 = sbr.rel (0) target = $region5
    $region4: #{dnn_forward.1} parent=1 // pred_region
      _
    $region5: #{dnn_forward.1} parent=1 // pred_fallthru
      _
    // Predicated region
    $region6: #{dnn_forward.1} parent=1 // pred_check
      _
    $region7: #{dnn_forward.1} parent=1 // pred_check_branch
      %18 = sbr.rel (0) target = $region9
    $region8: #{dnn_forward.1} parent=1 // pred_region
      _
    $region9: #{dnn_forward.1} parent=1 // pred_fallthru
      _
    // Predicated region
    $region10: #{dnn_forward.1} parent=1 // pred_check
      _
    $region11: #{dnn_forward.1} parent=1 // pred_check_branch
      %20 = sbr.rel (0) target = $region13
    $region12: #{dnn_forward.1} parent=1 // pred_region
      _
    $region13: #{dnn_forward.1} parent=1 // pred_fallthru
      _
    // Predicated region
    $region14: #{dnn_forward.1} parent=1 // pred_check
      _
    $region15: #{dnn_forward.1} parent=1 // pred_check_branch
      %22 = sbr.rel (0) target = $region17
    $region16: #{dnn_forward.1} parent=1 // pred_region
      _
    $region17: #{dnn_forward.1} parent=1 // pred_fallthru
      _
    // Predicated region
    $region18: #{dnn_forward.1} parent=1 // pred_check
      _
    $region19: #{dnn_forward.1} parent=1 // pred_check_branch
      %24 = sbr.rel (0) target = $region21
    $region20: #{dnn_forward.1} parent=1 // pred_region
      _
    $region21: #{dnn_forward.1} parent=1 // pred_fallthru
      _
    // Predicated region
    $region22: #{dnn_forward.1} parent=1 // pred_check
      _
    $region23: #{dnn_forward.1} parent=1 // pred_check_branch
      %26 = sbr.rel (0) target = $region25
    $region24: #{dnn_forward.1} parent=1 // pred_region
      _
    $region25: #{dnn_forward.1} parent=1 // pred_fallthru
      _
    // Predicated region
    $region26: #{dnn_forward.1} parent=1 // pred_check
      _
    $region27: #{dnn_forward.1} parent=1 // pred_check_branch
      %28 = sbr.rel (0) target = $region29
    $region28: #{dnn_forward.1} parent=1 // pred_region
      _
    $region29: #{dnn_forward.1} parent=1 // pred_fallthru
      _
    // Predicated region
    $region30: #{dnn_forward.1} parent=1 // pred_check
      _
    $region31: #{dnn_forward.1} parent=1 // pred_check_branch
      %30 = sbr.rel (0) target = $region33
    $region32: #{dnn_forward.1} parent=1 // pred_region
      _
    $region33: #{dnn_forward.1} parent=1 // pred_fallthru
      _
    // Predicated region
    $region34: #{dnn_forward.1} parent=1 // pred_check
      _
    $region35: #{dnn_forward.1} parent=1 // pred_check_branch
      %32 = sbr.rel (0) target = $region37
    $region36: #{dnn_forward.1} parent=1 // pred_region
      _
    $region37: #{dnn_forward.1} parent=1 // pred_fallthru
      _
    %v34 = vld [vmem:[%s0] sm:$0xff]
    %v35 = vpack.c.bf16 %v34, %v34
    %v36 = vld [vmem:[%s1] sm:$0xf]
    %v37 = vld [vmem:[%s1 + $0x4] sm:$0xf]
    %v38 = vld [vmem:[%s1 + $0x8] sm:$0xf]
    %v39 = vld [vmem:[%s1 + $0xc] sm:$0xf]
    %v40 = vld [vmem:[%s1 + $0x10] sm:$0xf]
    %v41 = vld [vmem:[%s1 + $0x14] sm:$0xf]
    %v42 = vld [vmem:[%s1 + $0x18] sm:$0xf]
    %v43 = vld [vmem:[%s1 + $0x1c] sm:$0xf]
    %v52 = vunpack.c.l.b16 %v36
    %v53 = vunpack.c.l.b16 %v37
    %v54 = vunpack.c.l.b16 %v38
    %v55 = vunpack.c.l.b16 %v39
    %v56 = vunpack.c.l.b16 %v40
    %v57 = vunpack.c.l.b16 %v41
    %v58 = vunpack.c.l.b16 %v42
    %v59 = vunpack.c.l.b16 %v43
    %v60 = vpack.c.b16 %v53, %v52
    %v61 = vpack.c.b16 %v55, %v54
    %v62 = vpack.c.b16 %v57, %v56
    %v63 = vpack.c.b16 %v59, %v58
    %vm68 = vcmask 523264
    %v70 = vsel %vm68, %v35, 0
    %72 = vmatprep.subr.bf16.mxu0 0
    %73 = vmatpush1.bf16.msra.mxu0 %v60
    %74 = vmatprep.subr.bf16.mxu0 0
    %75 = vmatpush1.bf16.msra.mxu0 %v61
    %76 = vmatprep.subr.bf16.mxu0 0
    %77 = vmatpush1.bf16.msra.mxu0 %v62
    %78 = vmatprep.subr.bf16.mxu0 0
    %79 = vmatpush1.bf16.msra.mxu0 %v63
    %80 = vmatprep.subr.bf16.mxu0 0
    %81 = vmatpush1.bf16.msra.mxu0 0
    %82 = vmatprep.subr.bf16.mxu0 0
    %83 = vmatpush1.bf16.msra.mxu0 0
    %84 = vmatprep.subr.bf16.mxu0 0
    %85 = vmatpush1.bf16.msra.mxu0 0
    %86 = vmatprep.subr.bf16.mxu0 0
    %87 = vmatpush1.bf16.msra.mxu0 0
    %88 = vmatprep.subr.bf16.mxu0 0
    %89 = vmatpush1.bf16.msra.mxu0 0
    %90 = vmatprep.subr.bf16.mxu0 0
    %91 = vmatpush1.bf16.msra.mxu0 0
    %92 = vmatprep.subr.bf16.mxu0 0
    %93 = vmatpush1.bf16.msra.mxu0 0
    %94 = vmatprep.subr.bf16.mxu0 0
    %95 = vmatpush1.bf16.msra.mxu0 0
    %96 = vmatprep.subr.bf16.mxu0 0
    %97 = vmatpush1.bf16.msra.mxu0 0
    %98 = vmatprep.subr.bf16.mxu0 0
    %99 = vmatpush1.bf16.msra.mxu0 0
    %100 = vmatprep.subr.bf16.mxu0 0
    %101 = vmatpush1.bf16.msra.mxu0 0
    %102 = vmatprep.subr.bf16.mxu0 0
    %103 = vmatpush1.bf16.msra.mxu0 0
    %104 = vmatprep.mubr.bf16.mxu0 0
    %105 = vmatmul.mubr.bf16.gmra.mrb[0].mxu0 %v70
    %v106 = vpop.f32.mrb[0].mxu0
    %v107 = vadd.f32 0.0, %v106
    %v108 = vpop.f32.mrb[0].mxu0
    %v109 = vpop.f32.mrb[0].mxu0
    %v110 = vpop.f32.mrb[0].mxu0
    %111 = vdwg.mxu0
    %v112 = vrot.slane %v107, 4
    %v113 = vadd.f32 %v107, %v112
    %v114 = vrot.slane %v113, 2
    %v115 = vadd.f32 %v113, %v114
    %v116 = vrot.slane %v115, 1
    %v117 = vadd.f32 %v115, %v116
    %v118 = vrcp.pop 8.0
    %v119 = vmul.f32 %v117, %v118
    %v120 = vsub.f32 %v107, %v119
    %v121 = vmul.f32 %v120, %v120
    %v122 = vrot.slane %v121, 4
    %v123 = vadd.f32 %v121, %v122
    %v124 = vrot.slane %v123, 2
    %v125 = vadd.f32 %v123, %v124
    %v126 = vrot.slane %v125, 1
    %v127 = vadd.f32 %v125, %v126
    %v128 = vmul.f32 %v127, %v118
    %v129 = vld [vmem:[%s2] sm:$0x1]
    %v130 = vadd.f32 %v128, 0.8
    %v131 = vrsqrt.pop %v130
    %v132 = vmul.f32 %v129, %v131
    %v134 = vlaneseq
    %v135 = vshrl.u32 %v134, 7
    %v136 = vsub.s32 0, %v135
    %v137 = vrot.slane %v132, %v136
    %v139 = vmul.f32 %v120, %v137
    %v140 = vld [vmem:[%s3] sm:$0x1]
    %v142 = vlaneseq
    %v143 = vshrl.u32 %v142, 7
    %v144 = vsub.s32 0, %v143
    %v145 = vrot.slane %v140, %v144
    %v147 = vadd.f32 %v139, %v145
    %v148 = vmul.f32 %v147, 0.2
    %v149 = vmax.f32 %v147, %v148
    %v150 = vpack.c.bf16 %v149, %v149
    %v151 = vld [vmem:[%s4] sm:$0xf]
    %v152 = vld [vmem:[%s4 + $0x4] sm:$0xf]
    %v153 = vld [vmem:[%s4 + $0x8] sm:$0xf]
    %v154 = vld [vmem:[%s4 + $0xc] sm:$0xf]
    %v155 = vld [vmem:[%s4 + $0x10] sm:$0xf]
    %v156 = vld [vmem:[%s4 + $0x14] sm:$0xf]
    %v157 = vld [vmem:[%s4 + $0x18] sm:$0xf]
    %v158 = vld [vmem:[%s4 + $0x1c] sm:$0xf]
    %v159 = vld [vmem:[%s4 + $0x20] sm:$0xf]
    %v160 = vld [vmem:[%s4 + $0x24] sm:$0xf]
    %v161 = vld [vmem:[%s4 + $0x28] sm:$0xf]
    %v162 = vld [vmem:[%s4 + $0x2c] sm:$0xf]
    %v163 = vld [vmem:[%s4 + $0x30] sm:$0xf]
    %v164 = vld [vmem:[%s4 + $0x34] sm:$0xf]
    %v165 = vld [vmem:[%s4 + $0x38] sm:$0xf]
    %v166 = vld [vmem:[%s4 + $0x3c] sm:$0xf]
    %v183 = vunpack.c.l.b16 %v151
    %v184 = vunpack.c.l.b16 %v152
    %v185 = vunpack.c.l.b16 %v153
    %v186 = vunpack.c.l.b16 %v154
    %v187 = vunpack.c.l.b16 %v155
    %v188 = vunpack.c.l.b16 %v156
    %v189 = vunpack.c.l.b16 %v157
    %v190 = vunpack.c.l.b16 %v158
    %v191 = vunpack.c.l.b16 %v159
    %v192 = vunpack.c.l.b16 %v160
    %v193 = vunpack.c.l.b16 %v161
    %v194 = vunpack.c.l.b16 %v162
    %v195 = vunpack.c.l.b16 %v163
    %v196 = vunpack.c.l.b16 %v164
    %v197 = vunpack.c.l.b16 %v165
    %v198 = vunpack.c.l.b16 %v166
    %v199 = vpack.c.b16 %v184, %v183
    %v200 = vpack.c.b16 %v186, %v185
    %v201 = vpack.c.b16 %v188, %v187
    %v202 = vpack.c.b16 %v190, %v189
    %v203 = vpack.c.b16 %v192, %v191
    %v204 = vpack.c.b16 %v194, %v193
    %v205 = vpack.c.b16 %v196, %v195
    %v206 = vpack.c.b16 %v198, %v197
    %215 = vmatprep.subr.bf16.mxu0 0
    %216 = vmatpush1.bf16.msra.mxu0 %v199
    %217 = vmatprep.subr.bf16.mxu0 0
    %218 = vmatpush1.bf16.msra.mxu0 %v200
    %219 = vmatprep.subr.bf16.mxu0 0
    %220 = vmatpush1.bf16.msra.mxu0 %v201
    %221 = vmatprep.subr.bf16.mxu0 0
    %222 = vmatpush1.bf16.msra.mxu0 %v202
    %223 = vmatprep.subr.bf16.mxu0 0
    %224 = vmatpush1.bf16.msra.mxu0 %v203
    %225 = vmatprep.subr.bf16.mxu0 0
    %226 = vmatpush1.bf16.msra.mxu0 %v204
    %227 = vmatprep.subr.bf16.mxu0 0
    %228 = vmatpush1.bf16.msra.mxu0 %v205
    %229 = vmatprep.subr.bf16.mxu0 0
    %230 = vmatpush1.bf16.msra.mxu0 %v206
    %231 = vmatprep.subr.bf16.mxu0 0
    %232 = vmatpush1.bf16.msra.mxu0 0
    %233 = vmatprep.subr.bf16.mxu0 0
    %234 = vmatpush1.bf16.msra.mxu0 0
    %235 = vmatprep.subr.bf16.mxu0 0
    %236 = vmatpush1.bf16.msra.mxu0 0
    %237 = vmatprep.subr.bf16.mxu0 0
    %238 = vmatpush1.bf16.msra.mxu0 0
    %239 = vmatprep.subr.bf16.mxu0 0
    %240 = vmatpush1.bf16.msra.mxu0 0
    %241 = vmatprep.subr.bf16.mxu0 0
    %242 = vmatpush1.bf16.msra.mxu0 0
    %243 = vmatprep.subr.bf16.mxu0 0
    %244 = vmatpush1.bf16.msra.mxu0 0
    %245 = vmatprep.subr.bf16.mxu0 0
    %246 = vmatpush1.bf16.msra.mxu0 0
    %247 = vmatprep.mubr.bf16.mxu0 0
    %248 = vmatmul.mubr.bf16.gmra.mrb[0].mxu0 %v150
    %v249 = vpop.f32.mrb[0].mxu0
    %v250 = vadd.f32 0.0, %v249
    %v251 = vpop.f32.mrb[0].mxu0
    %v252 = vpop.f32.mrb[0].mxu0
    %v253 = vpop.f32.mrb[0].mxu0
    %254 = vdwg.mxu0
    %vm255 = vcmask 261120
    %v256 = vsel %vm255, %v250, 0.0
    %v257 = vrot.slane %v256, 4
    %v258 = vadd.f32 %v256, %v257
    %v259 = vrot.slane %v258, 2
    %v260 = vadd.f32 %v258, %v259
    %v261 = vrot.slane %v260, 1
    %v262 = vadd.f32 %v260, %v261
    %v263 = vmul.f32 %v262, %v118
    %v264 = vsub.f32 %v250, %v263
    %v265 = vmul.f32 %v264, %v264
    %v266 = vsel %vm255, %v265, 0.0
    %v267 = vrot.slane %v266, 4
    %v268 = vadd.f32 %v266, %v267
    %v269 = vrot.slane %v268, 2
    %v270 = vadd.f32 %v268, %v269
    %v271 = vrot.slane %v270, 1
    %v272 = vadd.f32 %v270, %v271
    %v273 = vmul.f32 %v272, %v118
    %v274 = vld [vmem:[%s5] sm:$0x1]
    %v275 = vadd.f32 %v273, 0.8
    %v276 = vrsqrt.pop %v275
    %v277 = vmul.f32 %v274, %v276
    %v279 = vlaneseq
    %v280 = vshrl.u32 %v279, 7
    %v281 = vsub.s32 0, %v280
    %v282 = vrot.slane %v277, %v281
    %v284 = vmul.f32 %v264, %v282
    %v285 = vld [vmem:[%s6] sm:$0x1]
    %v287 = vlaneseq
    %v288 = vshrl.u32 %v287, 7
    %v289 = vsub.s32 0, %v288
    %v290 = vrot.slane %v285, %v289
    %v292 = vadd.f32 %v284, %v290
    %v293 = vmul.f32 %v292, 0.2
    %v294 = vmax.f32 %v292, %v293
    %v295 = vpack.c.bf16 %v294, %v294
    %v296 = vld [vmem:[%s7] sm:$0xf]
    %v297 = vld [vmem:[%s7 + $0x4] sm:$0xf]
    %v298 = vld [vmem:[%s7 + $0x8] sm:$0xf]
    %v299 = vld [vmem:[%s7 + $0xc] sm:$0xf]
    %v300 = vld [vmem:[%s8] sm:$0x1]
    %v302 = vlaneseq
    %v303 = vshrl.u32 %v302, 7
    %v304 = vsub.s32 0, %v303
    %v305 = vrot.slane %v300, %v304
    %v311 = vunpack.c.l.b16 %v296
    %v312 = vunpack.c.l.b16 %v297
    %v313 = vunpack.c.l.b16 %v298
    %v314 = vunpack.c.l.b16 %v299
    %v315 = vpack.c.b16 %v312, %v311
    %v316 = vpack.c.b16 %v314, %v313
    %v320 = vsel %vm255, %v295, 0
    %322 = vmatprep.subr.bf16.mxu0 0
    %323 = vmatpush1.bf16.msra.mxu0 %v315
    %324 = vmatprep.subr.bf16.mxu0 0
    %325 = vmatpush1.bf16.msra.mxu0 %v316
    %326 = vmatprep.subr.bf16.mxu0 0
    %327 = vmatpush1.bf16.msra.mxu0 0
    %328 = vmatprep.subr.bf16.mxu0 0
    %329 = vmatpush1.bf16.msra.mxu0 0
    %330 = vmatprep.subr.bf16.mxu0 0
    %331 = vmatpush1.bf16.msra.mxu0 0
    %332 = vmatprep.subr.bf16.mxu0 0
    %333 = vmatpush1.bf16.msra.mxu0 0
    %334 = vmatprep.subr.bf16.mxu0 0
    %335 = vmatpush1.bf16.msra.mxu0 0
    %336 = vmatprep.subr.bf16.mxu0 0
    %337 = vmatpush1.bf16.msra.mxu0 0
    %338 = vmatprep.subr.bf16.mxu0 0
    %339 = vmatpush1.bf16.msra.mxu0 0
    %340 = vmatprep.subr.bf16.mxu0 0
    %341 = vmatpush1.bf16.msra.mxu0 0
    %342 = vmatprep.subr.bf16.mxu0 0
    %343 = vmatpush1.bf16.msra.mxu0 0
    %344 = vmatprep.subr.bf16.mxu0 0
    %345 = vmatpush1.bf16.msra.mxu0 0
    %346 = vmatprep.subr.bf16.mxu0 0
    %347 = vmatpush1.bf16.msra.mxu0 0
    %348 = vmatprep.subr.bf16.mxu0 0
    %349 = vmatpush1.bf16.msra.mxu0 0
    %350 = vmatprep.subr.bf16.mxu0 0
    %351 = vmatpush1.bf16.msra.mxu0 0
    %352 = vmatprep.subr.bf16.mxu0 0
    %353 = vmatpush1.bf16.msra.mxu0 0
    %354 = vmatprep.mubr.bf16.mxu0 0
    %355 = vmatmul.mubr.bf16.gmra.mrb[0].mxu0 %v320
    %v356 = vpop.f32.mrb[0].mxu0
    %v357 = vadd.f32 %v305, %v356
    %v358 = vpop.f32.mrb[0].mxu0
    %v359 = vpop.f32.mrb[0].mxu0
    %v360 = vpop.f32.mrb[0].mxu0
    %361 = vdwg.mxu0
    %vm362 = vcmask 130048
    %363 = vst.msk [vmem:[#allocation2] sm:$0xff] %vm362, %v357
    // Predicated region
    $region38: #{dnn_forward.1} parent=1 // pred_check
      _
    $region39: #{dnn_forward.1} parent=1 // pred_check_branch
      %365 = sbr.rel (0) target = $region41
    $region40: #{dnn_forward.1} parent=1 // pred_region
      %s367 = ssub.s32 128, 128
      %368 = vsyncadd [#allocation3], %s367
      %s370 = sshll.u32 [#allocation2], 4
      %s371 = int_to_ptr.vmem [resolvable:$true] %s370
      %373 = dma.vmem_to_hbm [thread:$0]  %s371, 128, %s9, [#allocation3]
    $region41: #{dnn_forward.1} parent=1 // pred_fallthru
      _
    // Predicated region
    $region42: #{dnn_forward.1} parent=1 // pred_check
      _
    $region43: #{dnn_forward.1} parent=1 // pred_check_branch
      %375 = sbr.rel (0) target = $region45
    $region44: #{dnn_forward.1} parent=1 // pred_region
      %376 = dma.done [#allocation3], 128
    $region45: #{dnn_forward.1} parent=1 // pred_fallthru
      _
    %377 = vsyncpa [#allocation3], 1

</llo_original>
